<compile_context>
chip_gen: v5e
topology: v5e:2x2
jax: 0.10.0
libtpu: 0.0.40
codegen_flags: <defaults>
</compile_context>

<pallas_src>
import jax
import jax.numpy as jnp
from jax.experimental import pallas as pl
from jax.experimental.pallas import tpu as pltpu

LANE = 128      # lane (last-dim) width: output features zero-padded to 128
SUB = 8         # f32 sublane count: batch padded to a multiple of 8
K_PAD = 16      # padded contraction dim = max in_features over the 5 layers
N_LAYERS = 5
D_OUT = 8       # logical output feature count of the last layer

# (in_features, out_features) per nn.Linear, in forward order.
LAYER_DIMS = [(8, 4), (4, 16), (16, 16), (16, 4), (4, 8)]


def _nested_mlp_kernel(x_ref, w_ref, b_ref, o_ref):
    """Fused 5-layer linear chain, all data resident in VMEM/vregs.

    x_ref: [BP, 128]       zero-padded activations
    w_ref: [5, 16, 128]    per-layer [In_pad, Out_pad] weights (zero-padded)
    b_ref: [8, 128]        row i = bias of layer i (zero-padded, rows 5..7 = 0)
    o_ref: [BP, 128]
    """
    h = x_ref[...]
    b_all = b_ref[...]
    # Zero padding is exact for a pure linear chain: padded output lanes stay
    # zero and padded contraction rows of each weight are zero, so every
    # 16-deep MXU dot reproduces the unpadded result exactly.
    for i in range(N_LAYERS):
        h = jnp.dot(h[:, :K_PAD], w_ref[i],
                    preferred_element_type=jnp.float32) + b_all[i:i + 1, :]
    o_ref[...] = h.astype(o_ref.dtype)


@jax.jit
def _nested_forward(x, w_slab, b_tile):
    B, F = x.shape
    bp = max(SUB, pl.cdiv(B, SUB) * SUB)          # pad batch to sublane multiple

    x_pad = jnp.zeros((bp, LANE), x.dtype).at[:B, :F].set(x)

    flops = 2 * bp * K_PAD * LANE * N_LAYERS + bp * LANE * N_LAYERS
    bytes_accessed = 4 * (x_pad.size + w_slab.size + b_tile.size + bp * LANE)

    vmem_spec = pl.BlockSpec(memory_space=pltpu.MemorySpace.VMEM)

    out_pad = pl.pallas_call(
        _nested_mlp_kernel,
        out_shape=jax.ShapeDtypeStruct((bp, LANE), x.dtype),
        in_specs=[vmem_spec, vmem_spec, vmem_spec],
        out_specs=vmem_spec,
        cost_estimate=pl.CostEstimate(
            flops=flops, transcendentals=0, bytes_accessed=bytes_accessed),
    )(x_pad, w_slab, b_tile)

    # Strip the lane/sublane padding back to the logical [B, 8] output.
    return out_pad[:B, :D_OUT]


class NestedWrappedModule:
    """JAX/Pallas equivalent of the PyTorch NestedWrappedModule forward."""

    def __init__(self, key):
        keys = jax.random.split(key, 2 * N_LAYERS)
        # Deterministic synthetic init; PyTorch [out, in] convention kept for
        # the reference check.
        self.weights, self.biases = [], []
        for i, (fin, fout) in enumerate(LAYER_DIMS):
            bound = 1.0 / (fin ** 0.5)
            w = jax.random.uniform(keys[2 * i], (fout, fin), jnp.float32,
                                   -bound, bound)
            b = jax.random.uniform(keys[2 * i + 1], (fout,), jnp.float32,
                                   -bound, bound)
            self.weights.append(w)
            self.biases.append(b)

        # One-time layout prep (hoisted out of the per-call path):
        # stack all weights ([In, Out], zero-padded to [16, 128]) into one slab
        # and all biases into one [8, 128] tile -> 3 kernel operands total.
        w_slab = jnp.zeros((N_LAYERS, K_PAD, LANE), jnp.float32)
        b_tile = jnp.zeros((SUB, LANE), jnp.float32)
        for i, (w, b) in enumerate(zip(self.weights, self.biases)):
            wt = w.T                                   # [in, out]
            w_slab = w_slab.at[i, :wt.shape[0], :wt.shape[1]].set(wt)
            b_tile = b_tile.at[i, :b.shape[0]].set(b)
        self._w_slab = w_slab
        self._b_tile = b_tile

    def __call__(self, x):
        return self.forward(x)

    def forward(self, x):
        return _nested_forward(x, self._w_slab, self._b_tile)


if __name__ == "__main__":
    key = jax.random.PRNGKey(0)
    k_params, k_x = jax.random.split(key)

    model = NestedWrappedModule(k_params)

    # Mirrors NestedWrappedModule.get_input: torch.rand(4, 8)
    x = jax.random.uniform(k_x, (4, 8), dtype=jnp.float32)

    out = model(x)
    out = jax.block_until_ready(out)

    # Plain-JAX reference of the exact PyTorch forward (y = x @ W^T + b chain).
    ref = x
    for w, b in zip(model.weights, model.biases):
        ref = ref @ w.T + b

    assert out.shape == (4, 8)
    assert jnp.allclose(out, ref, atol=1e-5, rtol=1e-5)

    print("KERNEL_OK")
</pallas_src>

<mosaic_0001>
module attributes {stable_mosaic.version = 11 : i64} {
  func.func @_nested_mlp_kernel(%arg0: memref<8x128xf32, #tpu.memory_space<vmem>>, %arg1: memref<5x16x128xf32, #tpu.memory_space<vmem>>, %arg2: memref<8x128xf32, #tpu.memory_space<vmem>>, %arg3: memref<8x128xf32, #tpu.memory_space<vmem>>) attributes {dimension_semantics = [], scalar_prefetch = 0 : i64, scratch_operands = 0 : i64, tpu.core_type = #tpu.core_type<tc>} {
    %c0 = arith.constant 0 : index
    %c0_0 = arith.constant 0 : index
    %0 = vector.load %arg0[%c0, %c0_0] : memref<8x128xf32, #tpu.memory_space<vmem>>, vector<8x128xf32>
    %c0_1 = arith.constant 0 : index
    %c0_2 = arith.constant 0 : index
    %1 = vector.load %arg2[%c0_1, %c0_2] : memref<8x128xf32, #tpu.memory_space<vmem>>, vector<8x128xf32>
    %2 = vector.extract_strided_slice %0 {offsets = [0, 0], sizes = [8, 16], strides = [1, 1]} : vector<8x128xf32> to vector<8x16xf32>
    %c0_3 = arith.constant 0 : index
    %c0_4 = arith.constant 0 : index
    %c0_5 = arith.constant 0 : index
    %3 = vector.load %arg1[%c0_3, %c0_4, %c0_5] : memref<5x16x128xf32, #tpu.memory_space<vmem>>, vector<1x16x128xf32>
    %4 = vector.shape_cast %3 : vector<1x16x128xf32> to vector<16x128xf32>
    %cst = arith.constant dense<0.000000e+00> : vector<8x128xf32>
    %5 = tpu.matmul %2, %4, %cst {dimension_numbers = #tpu.dot_dimension_numbers<[1], [0], [0], [1], [0, 0, 1, 1], [], []>} : vector<8x16xf32>, vector<16x128xf32>, vector<8x128xf32> -> vector<8x128xf32>
    %6 = vector.extract_strided_slice %1 {offsets = [0, 0], sizes = [1, 128], strides = [1, 1]} : vector<8x128xf32> to vector<1x128xf32>
    %7 = vector.broadcast %6 : vector<1x128xf32> to vector<8x128xf32>
    %8 = arith.addf %5, %7 : vector<8x128xf32>
    %9 = vector.extract_strided_slice %8 {offsets = [0, 0], sizes = [8, 16], strides = [1, 1]} : vector<8x128xf32> to vector<8x16xf32>
    %c1 = arith.constant 1 : index
    %c0_6 = arith.constant 0 : index
    %c0_7 = arith.constant 0 : index
    %10 = vector.load %arg1[%c1, %c0_6, %c0_7] : memref<5x16x128xf32, #tpu.memory_space<vmem>>, vector<1x16x128xf32>
    %11 = vector.shape_cast %10 : vector<1x16x128xf32> to vector<16x128xf32>
    %cst_8 = arith.constant dense<0.000000e+00> : vector<8x128xf32>
    %12 = tpu.matmul %9, %11, %cst_8 {dimension_numbers = #tpu.dot_dimension_numbers<[1], [0], [0], [1], [0, 0, 1, 1], [], []>} : vector<8x16xf32>, vector<16x128xf32>, vector<8x128xf32> -> vector<8x128xf32>
    %13 = vector.extract_strided_slice %1 {offsets = [1, 0], sizes = [1, 128], strides = [1, 1]} : vector<8x128xf32> to vector<1x128xf32>
    %14 = vector.broadcast %13 : vector<1x128xf32> to vector<8x128xf32>
    %15 = arith.addf %12, %14 : vector<8x128xf32>
    %16 = vector.extract_strided_slice %15 {offsets = [0, 0], sizes = [8, 16], strides = [1, 1]} : vector<8x128xf32> to vector<8x16xf32>
    %c2 = arith.constant 2 : index
    %c0_9 = arith.constant 0 : index
    %c0_10 = arith.constant 0 : index
    %17 = vector.load %arg1[%c2, %c0_9, %c0_10] : memref<5x16x128xf32, #tpu.memory_space<vmem>>, vector<1x16x128xf32>
    %18 = vector.shape_cast %17 : vector<1x16x128xf32> to vector<16x128xf32>
    %cst_11 = arith.constant dense<0.000000e+00> : vector<8x128xf32>
    %19 = tpu.matmul %16, %18, %cst_11 {dimension_numbers = #tpu.dot_dimension_numbers<[1], [0], [0], [1], [0, 0, 1, 1], [], []>} : vector<8x16xf32>, vector<16x128xf32>, vector<8x128xf32> -> vector<8x128xf32>
    %20 = vector.extract_strided_slice %1 {offsets = [2, 0], sizes = [1, 128], strides = [1, 1]} : vector<8x128xf32> to vector<1x128xf32>
    %21 = vector.broadcast %20 : vector<1x128xf32> to vector<8x128xf32>
    %22 = arith.addf %19, %21 : vector<8x128xf32>
    %23 = vector.extract_strided_slice %22 {offsets = [0, 0], sizes = [8, 16], strides = [1, 1]} : vector<8x128xf32> to vector<8x16xf32>
    %c3 = arith.constant 3 : index
    %c0_12 = arith.constant 0 : index
    %c0_13 = arith.constant 0 : index
    %24 = vector.load %arg1[%c3, %c0_12, %c0_13] : memref<5x16x128xf32, #tpu.memory_space<vmem>>, vector<1x16x128xf32>
    %25 = vector.shape_cast %24 : vector<1x16x128xf32> to vector<16x128xf32>
    %cst_14 = arith.constant dense<0.000000e+00> : vector<8x128xf32>
    %26 = tpu.matmul %23, %25, %cst_14 {dimension_numbers = #tpu.dot_dimension_numbers<[1], [0], [0], [1], [0, 0, 1, 1], [], []>} : vector<8x16xf32>, vector<16x128xf32>, vector<8x128xf32> -> vector<8x128xf32>
    %27 = vector.extract_strided_slice %1 {offsets = [3, 0], sizes = [1, 128], strides = [1, 1]} : vector<8x128xf32> to vector<1x128xf32>
    %28 = vector.broadcast %27 : vector<1x128xf32> to vector<8x128xf32>
    %29 = arith.addf %26, %28 : vector<8x128xf32>
    %30 = vector.extract_strided_slice %29 {offsets = [0, 0], sizes = [8, 16], strides = [1, 1]} : vector<8x128xf32> to vector<8x16xf32>
    %c4 = arith.constant 4 : index
    %c0_15 = arith.constant 0 : index
    %c0_16 = arith.constant 0 : index
    %31 = vector.load %arg1[%c4, %c0_15, %c0_16] : memref<5x16x128xf32, #tpu.memory_space<vmem>>, vector<1x16x128xf32>
    %32 = vector.shape_cast %31 : vector<1x16x128xf32> to vector<16x128xf32>
    %cst_17 = arith.constant dense<0.000000e+00> : vector<8x128xf32>
    %33 = tpu.matmul %30, %32, %cst_17 {dimension_numbers = #tpu.dot_dimension_numbers<[1], [0], [0], [1], [0, 0, 1, 1], [], []>} : vector<8x16xf32>, vector<16x128xf32>, vector<8x128xf32> -> vector<8x128xf32>
    %34 = vector.extract_strided_slice %1 {offsets = [4, 0], sizes = [1, 128], strides = [1, 1]} : vector<8x128xf32> to vector<1x128xf32>
    %35 = vector.broadcast %34 : vector<1x128xf32> to vector<8x128xf32>
    %36 = arith.addf %33, %35 : vector<8x128xf32>
    %c0_18 = arith.constant 0 : index
    %c0_19 = arith.constant 0 : index
    %37 = vector.load %arg3[%c0_18, %c0_19] : memref<8x128xf32, #tpu.memory_space<vmem>>, vector<8x128xf32>
    tpu.vector_store %arg3[%c0_18, %c0_19], %36 {strides = array<i32>} : memref<8x128xf32, #tpu.memory_space<vmem>>, vector<8x128xf32>,
    return
  }
}

</mosaic_0001>

<llo_original>
// kernel: _nested_forward.1
$region0: #{_nested_forward.1}
  #allocation0 [shape = 'u32[]', space=smem, size = 0x4, offset = 0x4, fixed_abs, tag = 'smem constant byte address 0x4 - core index']
  #allocation1 [shape = 'u32[72,128]{1,0:T(1,128)}', space=vmem, size = 0x9000, scoped, tag = 'internal scratch']
  %s0 = inlined_call_operand.vmem [shape: f32[8,128], index: 0, kind: input, shape index: {}]
  %s1 = inlined_call_operand.hbm [shape: f32[5,16,128], index: 1, kind: input, shape index: {}]
  %s2 = inlined_call_operand.vmem [shape: f32[8,128], index: 2, kind: input, shape index: {}]
  %s3 = inlined_call_operand.vmem [shape: f32[8,128], index: 3, kind: output, shape index: {}]
  %s4 = sld [smem:[#allocation0]]
  $region26: #{_nested_forward.1} parent=0
    _
  %s6 = ssub.s32 1, %s4
  %s7 = scalar_select 0, %s6, %s4
  $region1: #{_nested_forward.1} parent=0
    #allocation2 [shape = 'u8[40960]{0}', space=vmem, size = 0xa000, scoped, tag = 'input window, operand 1, single buffered']
    #allocation3 [shape = 's32[1]{0}', space=sflag, size = 0x4, scoped, tag = 'scoped memory for _nested_forward.1']
    %8 = vsyncpa [#allocation3], 0
    // Predicated region
    $region2: #{_nested_forward.1} parent=1 // pred_check
      _
    $region3: #{_nested_forward.1} parent=1 // pred_check_branch
      %10 = sbr.rel (0) target = $region5
    $region4: #{_nested_forward.1} parent=1 // pred_region
      _
    $region5: #{_nested_forward.1} parent=1 // pred_fallthru
      _
    // Predicated region
    $region6: #{_nested_forward.1} parent=1 // pred_check
      _
    $region7: #{_nested_forward.1} parent=1 // pred_check_branch
      %12 = sbr.rel (0) target = $region9
    $region8: #{_nested_forward.1} parent=1 // pred_region
      %14 = vsyncadd [#allocation3], 0
      %s15 = sshll.u32 %s1, 4
      %s16 = int_to_ptr.hbm [resolvable:$true] %s15
      %s17 = sshll.u32 [#allocation2], 4
      %s18 = int_to_ptr.vmem [resolvable:$true] %s17
      %23 = dma.hbm_to_vmem [thread:$0]  %s16, 1280, %s18, [#allocation3], 128, 128, 8
    $region9: #{_nested_forward.1} parent=1 // pred_fallthru
      _
    // Predicated region
    $region10: #{_nested_forward.1} parent=1 // pred_check
      _
    $region11: #{_nested_forward.1} parent=1 // pred_check_branch
      %25 = sbr.rel (0) target = $region13
    $region12: #{_nested_forward.1} parent=1 // pred_region
      _
    $region13: #{_nested_forward.1} parent=1 // pred_fallthru
      _
    // Predicated region
    $region14: #{_nested_forward.1} parent=1 // pred_check
      _
    $region15: #{_nested_forward.1} parent=1 // pred_check_branch
      %27 = sbr.rel (0) target = $region17
    $region16: #{_nested_forward.1} parent=1 // pred_region
      %29 = dma.done [#allocation3], 1280
    $region17: #{_nested_forward.1} parent=1 // pred_fallthru
      _
    %v30 = vld [vmem:[%s0] sm:$0xff]
    %v31 = vld [vmem:[%s2] sm:$0xff]
    %v32 = vld [vmem:[#allocation2] sm:$0xff]
    %v33 = vld [vmem:[#allocation2 + $0x8] sm:$0xff]
    %v34 = vperm.slane %v31, 0
    %vm35 = vcmask 130048
    %v37 = vsel %vm35, %v30, 0
    %39 = vmatpush.msra.mxu0 0.0
    %40 = vmatpush.msra.mxu0 0.0
    %41 = vmatpush.msra.mxu0 0.0
    %42 = vmatpush.msra.mxu0 0.0
    %43 = vmatpush.msra.mxu0 0.0
    %44 = vmatpush.msra.mxu0 0.0
    %45 = vmatpush.msra.mxu0 0.0
    %46 = vmatpush.msra.mxu0 0.0
    %47 = vmatpush.msra.mxu0 0.0
    %48 = vmatpush.msra.mxu0 0.0
    %49 = vmatpush.msra.mxu0 0.0
    %50 = vmatpush.msra.mxu0 0.0
    %51 = vmatpush.msra.mxu0 0.0
    %52 = vmatpush.msra.mxu0 0.0
    %53 = vmatpush.msra.mxu0 %v33
    %54 = vmatpush.msra.mxu0 %v32
    %55 = vmatmul.f32.gmra.mxu0 %v37
    %v56 = vpop.f32.mrf.mxu0
    %v57 = vadd.f32 %v34, %v56
    %58 = vdwg.mxu0
    %s59 = scalar_lea.vmem [#allocation2], 16
    %v60 = vld [vmem:[%s59] sm:$0xff]
    %v61 = vld [vmem:[%s59 + $0x8] sm:$0xff]
    %v62 = vperm.slane %v31, 1
    %v64 = vsel %vm35, %v57, 0
    %66 = vmatpush.msra.mxu0 0.0
    %67 = vmatpush.msra.mxu0 0.0
    %68 = vmatpush.msra.mxu0 0.0
    %69 = vmatpush.msra.mxu0 0.0
    %70 = vmatpush.msra.mxu0 0.0
    %71 = vmatpush.msra.mxu0 0.0
    %72 = vmatpush.msra.mxu0 0.0
    %73 = vmatpush.msra.mxu0 0.0
    %74 = vmatpush.msra.mxu0 0.0
    %75 = vmatpush.msra.mxu0 0.0
    %76 = vmatpush.msra.mxu0 0.0
    %77 = vmatpush.msra.mxu0 0.0
    %78 = vmatpush.msra.mxu0 0.0
    %79 = vmatpush.msra.mxu0 0.0
    %80 = vmatpush.msra.mxu0 %v61
    %81 = vmatpush.msra.mxu0 %v60
    %82 = vmatmul.f32.gmra.mxu0 %v64
    %v83 = vpop.f32.mrf.mxu0
    %v84 = vadd.f32 %v62, %v83
    %85 = vdwg.mxu0
    %s86 = scalar_lea.vmem [#allocation2], 32
    %v87 = vld [vmem:[%s86] sm:$0xff]
    %v88 = vld [vmem:[%s86 + $0x8] sm:$0xff]
    %v89 = vperm.slane %v31, 2
    %v91 = vsel %vm35, %v84, 0
    %93 = vmatpush.msra.mxu0 0.0
    %94 = vmatpush.msra.mxu0 0.0
    %95 = vmatpush.msra.mxu0 0.0
    %96 = vmatpush.msra.mxu0 0.0
    %97 = vmatpush.msra.mxu0 0.0
    %98 = vmatpush.msra.mxu0 0.0
    %99 = vmatpush.msra.mxu0 0.0
    %100 = vmatpush.msra.mxu0 0.0
    %101 = vmatpush.msra.mxu0 0.0
    %102 = vmatpush.msra.mxu0 0.0
    %103 = vmatpush.msra.mxu0 0.0
    %104 = vmatpush.msra.mxu0 0.0
    %105 = vmatpush.msra.mxu0 0.0
    %106 = vmatpush.msra.mxu0 0.0
    %107 = vmatpush.msra.mxu0 %v88
    %108 = vmatpush.msra.mxu0 %v87
    %109 = vmatmul.f32.gmra.mxu0 %v91
    %v110 = vpop.f32.mrf.mxu0
    %v111 = vadd.f32 %v89, %v110
    %112 = vdwg.mxu0
    %s113 = scalar_lea.vmem [#allocation2], 48
    %v114 = vld [vmem:[%s113] sm:$0xff]
    %v115 = vld [vmem:[%s113 + $0x8] sm:$0xff]
    %v116 = vperm.slane %v31, 3
    %v118 = vsel %vm35, %v111, 0
    %120 = vmatpush.msra.mxu0 0.0
    %121 = vmatpush.msra.mxu0 0.0
    %122 = vmatpush.msra.mxu0 0.0
    %123 = vmatpush.msra.mxu0 0.0
    %124 = vmatpush.msra.mxu0 0.0
    %125 = vmatpush.msra.mxu0 0.0
    %126 = vmatpush.msra.mxu0 0.0
    %127 = vmatpush.msra.mxu0 0.0
    %128 = vmatpush.msra.mxu0 0.0
    %129 = vmatpush.msra.mxu0 0.0
    %130 = vmatpush.msra.mxu0 0.0
    %131 = vmatpush.msra.mxu0 0.0
    %132 = vmatpush.msra.mxu0 0.0
    %133 = vmatpush.msra.mxu0 0.0
    %134 = vmatpush.msra.mxu0 %v115
    %135 = vmatpush.msra.mxu0 %v114
    %136 = vmatmul.f32.gmra.mxu0 %v118
    %v137 = vpop.f32.mrf.mxu0
    %v138 = vadd.f32 %v116, %v137
    %139 = vdwg.mxu0
    %s140 = scalar_lea.vmem [#allocation2], 64
    %v141 = vld [vmem:[%s140] sm:$0xff]
    %v142 = vld [vmem:[%s140 + $0x8] sm:$0xff]
    %v143 = vperm.slane %v31, 4
    %v145 = vsel %vm35, %v138, 0
    %147 = vmatpush.msra.mxu0 0.0
    %148 = vmatpush.msra.mxu0 0.0
    %149 = vmatpush.msra.mxu0 0.0
    %150 = vmatpush.msra.mxu0 0.0
    %151 = vmatpush.msra.mxu0 0.0
    %152 = vmatpush.msra.mxu0 0.0
    %153 = vmatpush.msra.mxu0 0.0
    %154 = vmatpush.msra.mxu0 0.0
    %155 = vmatpush.msra.mxu0 0.0
    %156 = vmatpush.msra.mxu0 0.0
    %157 = vmatpush.msra.mxu0 0.0
    %158 = vmatpush.msra.mxu0 0.0
    %159 = vmatpush.msra.mxu0 0.0
    %160 = vmatpush.msra.mxu0 0.0
    %161 = vmatpush.msra.mxu0 %v142
    %162 = vmatpush.msra.mxu0 %v141
    %163 = vmatmul.f32.gmra.mxu0 %v145
    %v164 = vpop.f32.mrf.mxu0
    %v165 = vadd.f32 %v143, %v164
    %166 = vdwg.mxu0
    %167 = vst [vmem:[%s3] sm:$0xff] %v165
    // Predicated region
    $region18: #{_nested_forward.1} parent=1 // pred_check
      _
    $region19: #{_nested_forward.1} parent=1 // pred_check_branch
      %169 = sbr.rel (0) target = $region21
    $region20: #{_nested_forward.1} parent=1 // pred_region
      _
    $region21: #{_nested_forward.1} parent=1 // pred_fallthru
      _
    // Predicated region
    $region22: #{_nested_forward.1} parent=1 // pred_check
      _
    $region23: #{_nested_forward.1} parent=1 // pred_check_branch
      %171 = sbr.rel (0) target = $region25
    $region24: #{_nested_forward.1} parent=1 // pred_region
      _
    $region25: #{_nested_forward.1} parent=1 // pred_fallthru
      _
    %172 = vsyncpa [#allocation3], 1

</llo_original>
